<compile_context>
chip_gen: v6e
topology: v6e:2x2x1
jax: 0.10.0
libtpu: 0.0.40
codegen_flags: <defaults>
</compile_context>

<pallas_src>
import math

import jax
import jax.numpy as jnp
from jax.experimental import pallas as pl
from jax.experimental.pallas import tpu as pltpu


def _drop_path_kernel(scale_ref, x_ref, o_ref):
    # scale_ref: (1, TN) per-element scale = mask_b / keep_prob, repeated over
    #            D (and over the merged-row factor k); sublane-broadcast.
    # x_ref/o_ref: (TL, TN) tile of the lane-dense 2-D view of x.
    o_ref[...] = (x_ref[...] * scale_ref[...]).astype(o_ref.dtype)


def _choose_tiles(R, C, itemsize, tile_budget_bytes, lane_cap=32768):
    """Pick a lane-dense (TL, TN) tile for a (R, C) row-major view.

    TN: full row width when it fits the lane cap (fully contiguous HBM
        stripe), otherwise a multiple of 128 near the cap, preferring one that
        divides C so there is no ragged, partially masked last column tile.
    TL: biggest multiple of 8 that (a) keeps one tile under the budget and
        (b) leaves at least two row tiles so the 'parallel' grid axis can be
        sharded across v7x's two TensorCores.
    """
    if C <= lane_cap:
        TN = C                                        # full extent: legal
    else:
        cap128 = (lane_cap // 128) * 128
        TN = cap128
        for cand in range(cap128, max(cap128 // 2, 128) - 1, -128):
            if C % cand == 0:
                TN = cand
                break

    rows_budget = max(1, tile_budget_bytes // (TN * itemsize))
    if R <= 8:
        TL = R                                        # full extent: legal
    else:
        half = -(-R // 2)                             # cdiv(R, 2)
        half8 = -(-half // 8) * 8                     # round up to mult of 8
        TL = min(rows_budget, half8, R)
        TL = max(8, (TL // 8) * 8)
    return TL, TN


def drop_path_pallas(x_lbd, drop_prob, key, training=True, *,
                     tile_budget_bytes=8 << 20,
                     vmem_limit_bytes=52 * 1024 * 1024,
                     scale_in_x_dtype=False,
                     donate_x=False):
    """DropPath on an (L, B, D) sequence-first tensor. Returns (L, B, D)."""
    if drop_prob is None or drop_prob == 0.0 or not training:
        return x_lbd

    keep_prob = 1.0 - float(drop_prob)
    L, B, D = x_lbd.shape
    BD = B * D

    # Per-sample Bernoulli(keep_prob) mask and scale, in f32 (matches torch's
    # floor(keep_prob + rand()) up to the RNG stream).
    u = jax.random.uniform(key, (B,), dtype=jnp.float32)
    mask = jnp.floor(keep_prob + u)                   # 0.0 or 1.0, (B,)
    scale_b = mask / keep_prob                        # (B,) f32
    scale_bd = jnp.broadcast_to(scale_b[:, None], (B, D)).reshape(BD)

    # Lane-density fix: merge k consecutive L rows when B*D is not a multiple
    # of 128 so stores are unmasked full-width vst.
    k = 1
    if BD % 128 != 0:
        k = 128 // math.gcd(BD, 128)
        if L % k != 0:
            # TODO(synk): peel the L remainder into a second tiny call so the
            # bulk of rows still gets the lane-dense merged layout.
            k = 1                                     # fall back (correct)

    R, C = L // k, k * BD
    x2d = x_lbd.reshape(R, C)                         # free, contiguous view
    scale_row = jnp.tile(scale_bd, (k,)).reshape(1, C)
    if scale_in_x_dtype:
        scale_row = scale_row.astype(x_lbd.dtype)     # bf16 multiply path

    TL, TN = _choose_tiles(R, C, jnp.dtype(x_lbd.dtype).itemsize,
                           tile_budget_bytes)
    grid = (pl.cdiv(R, TL), pl.cdiv(C, TN))

    out2d = pl.pallas_call(
        _drop_path_kernel,
        out_shape=jax.ShapeDtypeStruct((R, C), x_lbd.dtype),
        grid=grid,
        in_specs=[
            # tiny scale row, re-fetched per column tile, broadcast over rows
            pl.BlockSpec((1, TN), lambda i, j: (0, j)),
            # streaming input tile (default depth-2 buffering is enough for a
            # 1-in/1-out HBM-bound kernel at these tile sizes)
            pl.BlockSpec((TL, TN), lambda i, j: (i, j)),
        ],
        out_specs=pl.BlockSpec((TL, TN), lambda i, j: (i, j)),
        # Only alias when the caller really donates x (jit donate_argnums);
        # otherwise XLA inserts a defensive copy (extra HBM pass).
        input_output_aliases=({1: 0} if donate_x else {}),
        compiler_params=pltpu.CompilerParams(
            dimension_semantics=("parallel", "parallel"),
            vmem_limit_bytes=vmem_limit_bytes,
        ),
    )(scale_row, x2d)

    # TODO(synk): for tiny latency-bound activations, fuse the mask generation
    # into the kernel via pltpu.prng_seed/prng_random_bits + scalar prefetch
    # to drop the wrapper-side XLA launches.
    return out2d.reshape(L, B, D)


def _reference(x_lbd, drop_prob, key):
    keep_prob = 1.0 - drop_prob
    B = x_lbd.shape[1]
    u = jax.random.uniform(key, (B,), dtype=jnp.float32)
    mask = jnp.floor(keep_prob + u)
    scale = mask / keep_prob
    return (x_lbd * scale[None, :, None]).astype(x_lbd.dtype)


if __name__ == "__main__":
    key = jax.random.PRNGKey(0)
    k_x, k_m, k_x2, k_m2, k_x3, k_m3, k_x4, k_m4 = jax.random.split(key, 8)

    drop_prob = 0.25

    # 1) (L, B, D) sequence-first, B*D = 64 < 128 -> exercises the row-merge
    #    lane-density path (merged view (4, 128)).
    L, B, D = 8, 2, 32
    x = jax.random.normal(k_x, (L, B, D), dtype=jnp.float32)
    out = jax.block_until_ready(drop_path_pallas(x, drop_prob, k_m,
                                                 training=True))
    ref = _reference(x, drop_prob, k_m)
    assert out.shape == x.shape and out.dtype == x.dtype
    assert jnp.allclose(out, ref, atol=1e-6), "mismatch (merged path)"

    # 2) Multi-row-tile grid with a ragged last tile: R=20 -> TL=16, grid=(2,1).
    L2, B2, D2 = 20, 2, 128
    x2 = jax.random.normal(k_x2, (L2, B2, D2), dtype=jnp.float32)
    out2 = jax.block_until_ready(drop_path_pallas(x2, drop_prob, k_m2,
                                                  training=True))
    ref2 = _reference(x2, drop_prob, k_m2)
    assert jnp.allclose(out2, ref2, atol=1e-6), "mismatch (tiled path)"

    # 3) B*D < 128 with L not divisible by the merge factor -> fallback layout.
    L3, B3, D3 = 7, 2, 32
    x3 = jax.random.normal(k_x3, (L3, B3, D3), dtype=jnp.float32)
    out3 = jax.block_until_ready(drop_path_pallas(x3, drop_prob, k_m3,
                                                  training=True))
    ref3 = _reference(x3, drop_prob, k_m3)
    assert jnp.allclose(out3, ref3, atol=1e-6), "mismatch (fallback path)"

    # 4) bf16 input, f32 scale math (default) -> matches reference ordering.
    L4, B4, D4 = 16, 4, 256
    x4 = jax.random.normal(k_x4, (L4, B4, D4), dtype=jnp.bfloat16)
    out4 = jax.block_until_ready(drop_path_pallas(x4, drop_prob, k_m4,
                                                  training=True))
    ref4 = _reference(x4, drop_prob, k_m4)
    assert jnp.allclose(out4.astype(jnp.float32), ref4.astype(jnp.float32),
                        atol=1e-2), "mismatch (bf16)"

    # 5) eval mode / drop_prob=0 -> identity
    out_eval = drop_path_pallas(x, drop_prob, k_m, training=False)
    assert jnp.array_equal(out_eval, x)
    out_p0 = drop_path_pallas(x, 0.0, k_m, training=True)
    assert jnp.array_equal(out_p0, x)

    print("KERNEL_OK")
</pallas_src>

<mosaic_0001>
module attributes {stable_mosaic.version = 11 : i64} {
  func.func @_drop_path_kernel(%arg0: i32, %arg1: i32, %arg2: memref<1x128xf32, #tpu.memory_space<vmem>>, %arg3: memref<4x128xf32, #tpu.memory_space<vmem>>, %arg4: memref<4x128xf32, #tpu.memory_space<vmem>>) attributes {dimension_semantics = [#tpu.dimension_semantics<parallel>, #tpu.dimension_semantics<parallel>], iteration_bounds = array<i64: 1, 1>, scalar_prefetch = 0 : i64, scratch_operands = 0 : i64, tpu.core_type = #tpu.core_type<tc>, window_params = [{transform_indices = @transform_0, window_bounds = array<i64: 1, 128>}, {transform_indices = @transform_1, window_bounds = array<i64: 4, 128>}, {transform_indices = @transform_2, window_bounds = array<i64: 4, 128>}]} {
    %c0 = arith.constant 0 : index
    %c0_0 = arith.constant 0 : index
    %0 = vector.load %arg3[%c0, %c0_0] : memref<4x128xf32, #tpu.memory_space<vmem>>, vector<4x128xf32>
    %c0_1 = arith.constant 0 : index
    %c0_2 = arith.constant 0 : index
    %1 = vector.load %arg2[%c0_1, %c0_2] : memref<1x128xf32, #tpu.memory_space<vmem>>, vector<1x128xf32>
    %2 = vector.broadcast %1 : vector<1x128xf32> to vector<4x128xf32>
    %3 = arith.mulf %0, %2 : vector<4x128xf32>
    %c0_3 = arith.constant 0 : index
    %c0_4 = arith.constant 0 : index
    %4 = vector.load %arg4[%c0_3, %c0_4] : memref<4x128xf32, #tpu.memory_space<vmem>>, vector<4x128xf32>
    tpu.vector_store %arg4[%c0_3, %c0_4], %3 {strides = array<i32>} : memref<4x128xf32, #tpu.memory_space<vmem>>, vector<4x128xf32>,
    return
  }
  func.func @transform_0(%arg0: i32, %arg1: i32) -> (i32, i32) {
    %c0_i32 = arith.constant 0 : i32
    %c0_i32_0 = arith.constant 0 : i32
    return %c0_i32, %arg1 : i32, i32
  }
  func.func @transform_1(%arg0: i32, %arg1: i32) -> (i32, i32) {
    %c0_i32 = arith.constant 0 : i32
    return %arg0, %arg1 : i32, i32
  }
  func.func @transform_2(%arg0: i32, %arg1: i32) -> (i32, i32) {
    %c0_i32 = arith.constant 0 : i32
    return %arg0, %arg1 : i32, i32
  }
}

</mosaic_0001>

<llo_original>
// kernel: tpu_custom_call.1
$region0: #{tpu_custom_call.1}
  #allocation0 [shape = 'u32[]', space=smem, size = 0x4, offset = 0x4, fixed_abs, tag = 'smem constant byte address 0x4 - core index']
  #allocation1 [shape = 'u32[144,128]{1,0:T(1,128)}', space=vmem, size = 0x12000, scoped, tag = 'internal scratch']
  %s0 = inlined_call_operand.hbm [shape: f32[1,128], index: 0, kind: input, shape index: {}]
  %s1 = inlined_call_operand.hbm [shape: f32[4,128], index: 1, kind: input, shape index: {}]
  %s2 = inlined_call_operand.hbm [shape: f32[4,128], index: 2, kind: output, shape index: {}]
  %s3 = sld [smem:[#allocation0]]
  $region26: #{tpu_custom_call.1} parent=0
    _
  %s5 = ssub.s32 1, %s3
  %s6 = scalar_select 0, %s5, %s3
  $region1: #{tpu_custom_call.1} parent=0
    #allocation2 [shape = 'u8[512]{0}', space=vmem, size = 0x400, scoped, tag = 'input window, operand 0, single buffered']
    #allocation3 [shape = 's32[1]{0}', space=sflag, size = 0x4, scoped, tag = 'scoped memory for tpu_custom_call.1']
    #allocation4 [shape = 's32[1]{0}', space=sflag, size = 0x4, scoped, tag = 'scoped memory for tpu_custom_call.1']
    #allocation5 [shape = 'u8[2048]{0}', space=vmem, size = 0x800, scoped, tag = 'input window, operand 1, single buffered']
    #allocation6 [shape = 's32[1]{0}', space=sflag, size = 0x4, scoped, tag = 'scoped memory for tpu_custom_call.1']
    #allocation7 [shape = 'u8[2048]{0}', space=vmem, size = 0x800, scoped, tag = 'output window, operand 0, single buffered']
    %7 = vsyncpa [#allocation3], 0
    %8 = vsyncpa [#allocation6], 0
    %9 = vsyncpa [#allocation4], 0
    // Predicated region
    $region2: #{tpu_custom_call.1} parent=1 // pred_check
      _
    $region3: #{tpu_custom_call.1} parent=1 // pred_check_branch
      %11 = sbr.rel (0) target = $region5
    $region4: #{tpu_custom_call.1} parent=1 // pred_region
      %s13 = ssub.s32 16, 16
      %14 = vsyncadd [#allocation3], %s13
      %s16 = sshll.u32 [#allocation2], 4
      %s17 = int_to_ptr.vmem [resolvable:$true] %s16
      %19 = dma.hbm_to_vmem [thread:$0]  %s0, 16, %s17, [#allocation3]
    $region5: #{tpu_custom_call.1} parent=1 // pred_fallthru
      _
    // Predicated region
    $region6: #{tpu_custom_call.1} parent=1 // pred_check
      _
    $region7: #{tpu_custom_call.1} parent=1 // pred_check_branch
      %21 = sbr.rel (0) target = $region9
    $region8: #{tpu_custom_call.1} parent=1 // pred_region
      %s23 = ssub.s32 64, 64
      %24 = vsyncadd [#allocation6], %s23
      %s26 = sshll.u32 [#allocation5], 4
      %s27 = int_to_ptr.vmem [resolvable:$true] %s26
      %29 = dma.hbm_to_vmem [thread:$0]  %s1, 64, %s27, [#allocation6]
    $region9: #{tpu_custom_call.1} parent=1 // pred_fallthru
      _
    // Predicated region
    $region10: #{tpu_custom_call.1} parent=1 // pred_check
      _
    $region11: #{tpu_custom_call.1} parent=1 // pred_check_branch
      %31 = sbr.rel (0) target = $region13
    $region12: #{tpu_custom_call.1} parent=1 // pred_region
      %32 = dma.done [#allocation3], 16
    $region13: #{tpu_custom_call.1} parent=1 // pred_fallthru
      _
    // Predicated region
    $region14: #{tpu_custom_call.1} parent=1 // pred_check
      _
    $region15: #{tpu_custom_call.1} parent=1 // pred_check_branch
      %34 = sbr.rel (0) target = $region17
    $region16: #{tpu_custom_call.1} parent=1 // pred_region
      %35 = dma.done [#allocation6], 64
    $region17: #{tpu_custom_call.1} parent=1 // pred_fallthru
      _
    %v36 = vld [vmem:[#allocation5] sm:$0xf]
    %v37 = vld [vmem:[#allocation2] sm:$0x1]
    %v39 = vlaneseq
    %v40 = vshrl.u32 %v39, 7
    %v41 = vsub.s32 0, %v40
    %v42 = vrot.slane %v37, %v41
    %v44 = vmul.f32 %v36, %v42
    %45 = vst [vmem:[#allocation7] sm:$0xf] %v44
    // Predicated region
    $region18: #{tpu_custom_call.1} parent=1 // pred_check
      _
    $region19: #{tpu_custom_call.1} parent=1 // pred_check_branch
      %47 = sbr.rel (0) target = $region21
    $region20: #{tpu_custom_call.1} parent=1 // pred_region
      %s49 = ssub.s32 64, 64
      %50 = vsyncadd [#allocation4], %s49
      %s52 = sshll.u32 [#allocation7], 4
      %s53 = int_to_ptr.vmem [resolvable:$true] %s52
      %55 = dma.vmem_to_hbm [thread:$0]  %s53, 64, %s2, [#allocation4]
    $region21: #{tpu_custom_call.1} parent=1 // pred_fallthru
      _
    // Predicated region
    $region22: #{tpu_custom_call.1} parent=1 // pred_check
      _
    $region23: #{tpu_custom_call.1} parent=1 // pred_check_branch
      %57 = sbr.rel (0) target = $region25
    $region24: #{tpu_custom_call.1} parent=1 // pred_region
      %58 = dma.done [#allocation4], 64
    $region25: #{tpu_custom_call.1} parent=1 // pred_fallthru
      _
    %59 = vsyncpa [#allocation3], 1
    %60 = vsyncpa [#allocation6], 1
    %61 = vsyncpa [#allocation4], 1

</llo_original>
